<compile_context>
chip_gen: v6e
topology: v6e:2x2x1
jax: 0.10.0
libtpu: 0.0.40
codegen_flags: <defaults>
</compile_context>

<pallas_src>
import jax
import jax.numpy as jnp
import numpy as np
from jax import lax
from jax.experimental import pallas as pl
from jax.experimental.pallas import tpu as pltpu

_LANES = 128
_SUBLANES = 8
_TARGET_TILE_BYTES = 4 * 1024 * 1024   # per input buffer (Pallas double-buffers it)
_NUM_SHARDS = 2                        # megacore split for v7x; harmless on 1-TC chips
_VMEM_LIMIT_BYTES = 32 * 1024 * 1024   # generous headroom, under every chip's physical VMEM


def _round_up(x, m):
    return (x + m - 1) // m * m


def _make_kernel(tile_rows, steps, rows, full_tiles):
    """Builds the kernel with all sizes baked in as compile-time constants."""

    def kernel(x_ref, out_ref):
        c = pl.program_id(0)              # shard index ("parallel" / megacore axis)
        i = pl.program_id(1)              # step within shard (reduction axis)
        tile_idx = c * steps + i          # logical row-tile index (may overshoot)

        @pl.when(i == 0)
        def _init():
            out_ref[...] = jnp.zeros_like(out_ref)

        x = x_ref[...].astype(jnp.float32)

        # Hot path: fully in-bounds tiles -> pure mul + element-wise vreg adds.
        @pl.when(tile_idx < full_tiles)
        def _full_tile():
            sq = x * x
            out_ref[...] += jnp.sum(
                sq.reshape(tile_rows // _SUBLANES, _SUBLANES, _LANES), axis=0)

        # Ragged / overflow tiles: zero out rows past the logical end (OOB rows
        # of a partial block contain garbage; overshoot steps are fully masked).
        @pl.when(tile_idx >= full_tiles)
        def _ragged_tile():
            row = lax.broadcasted_iota(jnp.int32, (tile_rows, _LANES), 0)
            valid = (row + tile_idx * tile_rows) < rows
            sq = jnp.where(valid, x, 0.0)
            sq = sq * sq
            out_ref[...] += jnp.sum(
                sq.reshape(tile_rows // _SUBLANES, _SUBLANES, _LANES), axis=0)

    return kernel


def l2_prior(x):
    """Pallas TPU equivalent of L2Prior.forward: sum(x ** 2) -> scalar."""
    out_dtype = x.dtype
    x_flat = x.reshape(-1)
    n = int(x_flat.shape[0])
    if n == 0:
        return jnp.zeros((), dtype=out_dtype)

    itemsize = int(np.dtype(x.dtype).itemsize)

    # Lane-dense (rows, 128) view.  Only the sub-128 remainder gets padded.
    rows = pl.cdiv(n, _LANES)
    padded_n = rows * _LANES
    if padded_n != n:
        x_flat = jnp.pad(x_flat, (0, padded_n - n))   # <= 127 zeros
    x2d = x_flat.reshape(rows, _LANES)

    # Tile sized by bytes (~4 MiB per buffer), multiple of 8 sublanes.
    tile_rows = max(
        _SUBLANES,
        (_TARGET_TILE_BYTES // (_LANES * itemsize)) // _SUBLANES * _SUBLANES,
    )
    tile_rows = min(tile_rows, _round_up(rows, _SUBLANES))

    n_tiles = pl.cdiv(rows, tile_rows)
    full_tiles = rows // tile_rows            # tiles with no out-of-bounds rows
    num_shards = min(_NUM_SHARDS, n_tiles)    # leading "parallel" axis (megacore)
    steps = pl.cdiv(n_tiles, num_shards)      # row-tiles per shard

    def x_index_map(c, i):
        # Clamp so overshoot steps (when n_tiles % num_shards != 0) re-read the
        # last tile; the kernel fully masks their contribution.
        return (jnp.minimum(c * steps + i, n_tiles - 1), 0)

    kernel = _make_kernel(tile_rows, steps, rows, full_tiles)

    partial = pl.pallas_call(
        kernel,
        out_shape=jax.ShapeDtypeStruct((num_shards * _SUBLANES, _LANES), jnp.float32),
        grid=(num_shards, steps),
        in_specs=[pl.BlockSpec((tile_rows, _LANES), x_index_map)],
        out_specs=pl.BlockSpec((_SUBLANES, _LANES), lambda c, i: (c, 0)),
        compiler_params=pltpu.CompilerParams(
            # Shard axis is independent (megacore on v7x); step axis is the
            # reduction (output block resident across it).
            dimension_semantics=("parallel", "arbitrary"),
            vmem_limit_bytes=_VMEM_LIMIT_BYTES,
        ),
        cost_estimate=pl.CostEstimate(
            flops=2 * n,
            transcendentals=0,
            bytes_accessed=padded_n * itemsize
            + num_shards * _SUBLANES * _LANES * 4,
        ),
    )(x2d)

    # Tiny final reduce of the per-shard (8, 128) partials, left to XLA.
    return jnp.sum(partial).astype(out_dtype)


if __name__ == "__main__":
    key = jax.random.PRNGKey(0)

    # Small example input consistent with a generic prior term.
    x = jax.random.normal(key, (2, 4, 16, 16), dtype=jnp.float32)
    out = jax.block_until_ready(l2_prior(x))
    ref = jnp.sum(x.astype(jnp.float32) ** 2)
    np.testing.assert_allclose(float(out), float(ref), rtol=1e-5, atol=1e-6)

    # Unaligned size (sub-128 remainder padding path + masked ragged tile).
    x2 = jax.random.normal(jax.random.PRNGKey(1), (2, 69), dtype=jnp.float32)
    out2 = jax.block_until_ready(l2_prior(x2))
    ref2 = jnp.sum(x2 ** 2)
    np.testing.assert_allclose(float(out2), float(ref2), rtol=1e-5, atol=1e-6)

    # Multi-tile path: exercises the 2-shard "parallel" split, the masked
    # ragged last tile, and the clamped overflow step (n_tiles odd).
    x3 = jax.random.normal(jax.random.PRNGKey(2), (2_100_000,), dtype=jnp.float32)
    out3 = jax.block_until_ready(l2_prior(x3))
    ref3 = jnp.sum(x3 ** 2)
    np.testing.assert_allclose(float(out3), float(ref3), rtol=1e-4, atol=1e-2)

    # bf16 input (accumulated in f32 inside the kernel).
    x4 = jax.random.normal(jax.random.PRNGKey(3), (64, 384), dtype=jnp.bfloat16)
    out4 = jax.block_until_ready(l2_prior(x4))
    ref4 = jnp.sum(x4.astype(jnp.float32) ** 2)
    np.testing.assert_allclose(float(out4), float(ref4), rtol=2e-2, atol=1e-2)

    # Empty-input guard.
    out5 = jax.block_until_ready(l2_prior(jnp.zeros((0, 7), jnp.float32)))
    assert float(out5) == 0.0

    print("KERNEL_OK")
</pallas_src>

<mosaic_0001>
module attributes {stable_mosaic.version = 11 : i64} {
  func.func @kernel(%arg0: i32, %arg1: i32, %arg2: memref<16x128xf32, #tpu.memory_space<vmem>>, %arg3: memref<8x128xf32, #tpu.memory_space<vmem>>) attributes {dimension_semantics = [#tpu.dimension_semantics<parallel>, #tpu.dimension_semantics<arbitrary>], iteration_bounds = array<i64: 1, 1>, scalar_prefetch = 0 : i64, scratch_operands = 0 : i64, tpu.core_type = #tpu.core_type<tc>, window_params = [{transform_indices = @transform_0, window_bounds = array<i64: 16, 128>}, {transform_indices = @transform_1, window_bounds = array<i64: 8, 128>}]} {
    %c1_i32 = arith.constant 1 : i32
    %0 = arith.muli %arg0, %c1_i32 : i32
    %1 = arith.addi %0, %arg1 : i32
    %c0_i32 = arith.constant 0 : i32
    %2 = arith.cmpi eq, %arg1, %c0_i32 : i32
    %3 = arith.extui %2 : i1 to i32
    %c0_i32_0 = arith.constant 0 : i32
    %4 = arith.cmpi ne, %3, %c0_i32_0 : i32
    scf.if %4 {
      %cst = arith.constant 0.000000e+00 : f32
      %12 = vector.broadcast %cst : f32 to vector<8x128xf32>
      %c0_6 = arith.constant 0 : index
      %c0_7 = arith.constant 0 : index
      %13 = vector.load %arg3[%c0_6, %c0_7] : memref<8x128xf32, #tpu.memory_space<vmem>>, vector<8x128xf32>
      tpu.vector_store %arg3[%c0_6, %c0_7], %12 {strides = array<i32>} : memref<8x128xf32, #tpu.memory_space<vmem>>, vector<8x128xf32>,
    } else {
    }
    %c0 = arith.constant 0 : index
    %c0_1 = arith.constant 0 : index
    %5 = vector.load %arg2[%c0, %c0_1] : memref<16x128xf32, #tpu.memory_space<vmem>>, vector<16x128xf32>
    %c1_i32_2 = arith.constant 1 : i32
    %6 = arith.cmpi slt, %1, %c1_i32_2 : i32
    %7 = arith.extui %6 : i1 to i32
    %c0_i32_3 = arith.constant 0 : i32
    %8 = arith.cmpi ne, %7, %c0_i32_3 : i32
    scf.if %8 {
      %12 = arith.mulf %5, %5 : vector<16x128xf32>
      %c0_6 = arith.constant 0 : index
      %c0_7 = arith.constant 0 : index
      %13 = vector.load %arg3[%c0_6, %c0_7] : memref<8x128xf32, #tpu.memory_space<vmem>>, vector<8x128xf32>
      %14 = vector.shape_cast %12 : vector<16x128xf32> to vector<2x8x128xf32>
      %cst = arith.constant dense<0.000000e+00> : vector<8x128xf32>
      %15 = vector.multi_reduction <add>, %14, %cst [0] : vector<2x8x128xf32> to vector<8x128xf32>
      %16 = arith.addf %13, %15 : vector<8x128xf32>
      %c0_8 = arith.constant 0 : index
      %c0_9 = arith.constant 0 : index
      %17 = vector.load %arg3[%c0_8, %c0_9] : memref<8x128xf32, #tpu.memory_space<vmem>>, vector<8x128xf32>
      tpu.vector_store %arg3[%c0_8, %c0_9], %16 {strides = array<i32>} : memref<8x128xf32, #tpu.memory_space<vmem>>, vector<8x128xf32>,
    } else {
    }
    %c1_i32_4 = arith.constant 1 : i32
    %9 = arith.cmpi sge, %1, %c1_i32_4 : i32
    %10 = arith.extui %9 : i1 to i32
    %c0_i32_5 = arith.constant 0 : i32
    %11 = arith.cmpi ne, %10, %c0_i32_5 : i32
    scf.if %11 {
      %12 = tpu.iota {dimensions = array<i32: 0>} : vector<16x128xi32>
      %c16_i32 = arith.constant 16 : i32
      %13 = arith.muli %1, %c16_i32 : i32
      %14 = vector.broadcast %13 : i32 to vector<16x128xi32>
      %15 = arith.addi %12, %14 : vector<16x128xi32>
      %c16_i32_6 = arith.constant 16 : i32
      %16 = vector.broadcast %c16_i32_6 : i32 to vector<16x128xi32>
      %17 = arith.cmpi slt, %15, %16 : vector<16x128xi32>
      %cst = arith.constant 0.000000e+00 : f32
      %18 = vector.broadcast %cst : f32 to vector<16x128xf32>
      %19 = arith.select %17, %5, %18 : vector<16x128xi1>, vector<16x128xf32>
      %20 = arith.mulf %19, %19 : vector<16x128xf32>
      %c0_7 = arith.constant 0 : index
      %c0_8 = arith.constant 0 : index
      %21 = vector.load %arg3[%c0_7, %c0_8] : memref<8x128xf32, #tpu.memory_space<vmem>>, vector<8x128xf32>
      %22 = vector.shape_cast %20 : vector<16x128xf32> to vector<2x8x128xf32>
      %cst_9 = arith.constant dense<0.000000e+00> : vector<8x128xf32>
      %23 = vector.multi_reduction <add>, %22, %cst_9 [0] : vector<2x8x128xf32> to vector<8x128xf32>
      %24 = arith.addf %21, %23 : vector<8x128xf32>
      %c0_10 = arith.constant 0 : index
      %c0_11 = arith.constant 0 : index
      %25 = vector.load %arg3[%c0_10, %c0_11] : memref<8x128xf32, #tpu.memory_space<vmem>>, vector<8x128xf32>
      tpu.vector_store %arg3[%c0_10, %c0_11], %24 {strides = array<i32>} : memref<8x128xf32, #tpu.memory_space<vmem>>, vector<8x128xf32>,
    } else {
    }
    return
  }
  func.func @transform_0(%arg0: i32, %arg1: i32) -> (i32, i32) {
    %c1_i32 = arith.constant 1 : i32
    %0 = arith.muli %arg0, %c1_i32 : i32
    %1 = arith.addi %0, %arg1 : i32
    %c0_i32 = arith.constant 0 : i32
    %2 = arith.minsi %1, %c0_i32 : i32
    %c0_i32_0 = arith.constant 0 : i32
    %c0_i32_1 = arith.constant 0 : i32
    return %2, %c0_i32_0 : i32, i32
  }
  func.func @transform_1(%arg0: i32, %arg1: i32) -> (i32, i32) {
    %c0_i32 = arith.constant 0 : i32
    %c0_i32_0 = arith.constant 0 : i32
    return %arg0, %c0_i32 : i32, i32
  }
}

</mosaic_0001>

<llo_original>
// kernel: tpu_custom_call.1
$region0: #{tpu_custom_call.1}
  #allocation0 [shape = 'u32[]', space=smem, size = 0x4, offset = 0x4, fixed_abs, tag = 'smem constant byte address 0x4 - core index']
  #allocation1 [shape = 'u32[144,128]{1,0:T(1,128)}', space=vmem, size = 0x12000, scoped, tag = 'internal scratch']
  %s0 = inlined_call_operand.hbm [shape: f32[16,128], index: 0, kind: input, shape index: {}]
  %s1 = inlined_call_operand.hbm [shape: f32[8,128], index: 1, kind: output, shape index: {}]
  %s2 = sld [smem:[#allocation0]]
  $region30: #{tpu_custom_call.1} parent=0
    _
  %s4 = ssub.s32 1, %s2
  %s5 = scalar_select 0, %s4, %s2
  $region1: #{tpu_custom_call.1} parent=0
    #allocation2 [shape = 'u8[8192]{0}', space=vmem, size = 0x2000, scoped, tag = 'input window, operand 0, single buffered']
    #allocation3 [shape = 's32[1]{0}', space=sflag, size = 0x4, scoped, tag = 'scoped memory for tpu_custom_call.1']
    #allocation4 [shape = 's32[1]{0}', space=sflag, size = 0x4, scoped, tag = 'scoped memory for tpu_custom_call.1']
    #allocation5 [shape = 'u8[4096]{0}', space=vmem, size = 0x1000, scoped, tag = 'output window, operand 0, single buffered']
    %6 = vsyncpa [#allocation3], 0
    %7 = vsyncpa [#allocation4], 0
    // Predicated region
    $region2: #{tpu_custom_call.1} parent=1 // pred_check
      _
    $region3: #{tpu_custom_call.1} parent=1 // pred_check_branch
      %9 = sbr.rel (0) target = $region5
    $region4: #{tpu_custom_call.1} parent=1 // pred_region
      %s10 = sadd.s32 0, 0
      %p11 = scmp.lt.s32.totalorder %s10, 0
      %s12 = scalar_select %p11, %s10, 0
      %s13 = smul.u32 2, %s12
      %s15 = ssub.s32 256, 256
      %16 = vsyncadd [#allocation3], %s15
      %s17 = smul.addr %s13, 128
      %s18 = scalar_lea.hbm %s0, %s17
      %s19 = sshll.u32 [#allocation2], 4
      %s20 = int_to_ptr.vmem [resolvable:$true] %s19
      %25 = dma.hbm_to_vmem [thread:$0]  %s18, 256, %s20, [#allocation3], 128, 128, 8
    $region5: #{tpu_custom_call.1} parent=1 // pred_fallthru
      _
    // Predicated region
    $region6: #{tpu_custom_call.1} parent=1 // pred_check
      _
    $region7: #{tpu_custom_call.1} parent=1 // pred_check_branch
      %27 = sbr.rel (0) target = $region9
    $region8: #{tpu_custom_call.1} parent=1 // pred_region
      %28 = dma.done [#allocation3], 256
    $region9: #{tpu_custom_call.1} parent=1 // pred_fallthru
      _
    %s29 = sadd.s32 0, 0
    %p30 = scmp.lt.s32.totalorder %s29, 0
    %s31 = scalar_select %p30, %s29, 0
    %s32 = smul.u32 2, %s31
    %s33 = sadd.s32 0, 0
    %p34 = scmp.eq.s32.totalorder 0, 0
    // Predicated region
    $region10: #{tpu_custom_call.1} parent=1 // pred_check
      %p35 = pneg %p34
    $region11: #{tpu_custom_call.1} parent=1 // pred_check_branch
      %37 = sbr.rel (%p35) target = $region13
    $region12: #{tpu_custom_call.1} parent=1 // pred_region
      %38 = vst [vmem:[#allocation5] sm:$0xff] 0.0
    $region13: #{tpu_custom_call.1} parent=1 // pred_fallthru
      _
    %v39 = vld [vmem:[#allocation2] sm:$0xff]
    %v40 = vld [vmem:[#allocation2 + $0x8] sm:$0xff]
    %p41 = scmp.lt.s32.totalorder %s33, 1
    // Predicated region
    $region14: #{tpu_custom_call.1} parent=1 // pred_check
      %p42 = pneg %p41
    $region15: #{tpu_custom_call.1} parent=1 // pred_check_branch
      %44 = sbr.rel (%p42) target = $region17
    $region16: #{tpu_custom_call.1} parent=1 // pred_region
      %v45 = vmul.f32 %v39, %v39
      %v46 = vmul.f32 %v40, %v40
      %v47 = vld [vmem:[#allocation5] sm:$0xff]
      %v48 = vadd.f32 %v45, %v46
      %v49 = vadd.f32 %v47, %v48
      %50 = vst [vmem:[#allocation5] sm:$0xff] %v49
    $region17: #{tpu_custom_call.1} parent=1 // pred_fallthru
      _
    %p51 = scmp.ge.s32.totalorder %s33, 1
    // Predicated region
    $region18: #{tpu_custom_call.1} parent=1 // pred_check
      %p52 = pneg %p51
    $region19: #{tpu_custom_call.1} parent=1 // pred_check_branch
      %54 = sbr.rel (%p52) target = $region21
    $region20: #{tpu_custom_call.1} parent=1 // pred_region
      %v55 = vlaneseq
      %v56 = vshrl.u32 %v55, 7
      %v57 = vadd.s32 %v56, 8
      %s58 = smul.u32 %s33, 16
      %v59 = vstv %s58
      %v60 = vadd.s32 %v56, %v59
      %v61 = vadd.s32 %v57, %v59
      %vm62 = vcmp.lt.s32.totalorder %v60, 16
      %vm63 = vcmp.lt.s32.totalorder %v61, 16
      %v64 = vsel %vm62, %v39, 0.0
      %v65 = vsel %vm63, %v40, 0.0
      %v66 = vmul.f32 %v64, %v64
      %v67 = vmul.f32 %v65, %v65
      %v68 = vld [vmem:[#allocation5] sm:$0xff]
      %v69 = vadd.f32 %v66, %v67
      %v70 = vadd.f32 %v68, %v69
      %71 = vst [vmem:[#allocation5] sm:$0xff] %v70
    $region21: #{tpu_custom_call.1} parent=1 // pred_fallthru
      _
    // Predicated region
    $region22: #{tpu_custom_call.1} parent=1 // pred_check
      _
    $region23: #{tpu_custom_call.1} parent=1 // pred_check_branch
      %73 = sbr.rel (0) target = $region25
    $region24: #{tpu_custom_call.1} parent=1 // pred_region
      %s75 = ssub.s32 128, 128
      %76 = vsyncadd [#allocation4], %s75
      %s78 = sshll.u32 [#allocation5], 4
      %s79 = int_to_ptr.vmem [resolvable:$true] %s78
      %81 = dma.vmem_to_hbm [thread:$0]  %s79, 128, %s1, [#allocation4]
    $region25: #{tpu_custom_call.1} parent=1 // pred_fallthru
      _
    // Predicated region
    $region26: #{tpu_custom_call.1} parent=1 // pred_check
      _
    $region27: #{tpu_custom_call.1} parent=1 // pred_check_branch
      %83 = sbr.rel (0) target = $region29
    $region28: #{tpu_custom_call.1} parent=1 // pred_region
      %84 = dma.done [#allocation4], 128
    $region29: #{tpu_custom_call.1} parent=1 // pred_fallthru
      _
    %85 = vsyncpa [#allocation3], 1
    %86 = vsyncpa [#allocation4], 1

</llo_original>
